<compile_context>
chip_gen: v7x
topology: tpu7x:2x2x1
jax: 0.10.0
libtpu: 0.0.40
codegen_flags: <defaults>
</compile_context>

<pallas_src>
import functools

import jax
import jax.numpy as jnp
from jax.experimental import pallas as pl
from jax.experimental.pallas import tpu as pltpu


def _yang_kernel(gt_ref, out_ref, *, C, CH, TH, W, stride):
    """One (batch, row-tile) grid step.

    gt_ref : (1, C, TH, W) input tile (cast to f32 in-kernel).
    out_ref: (1, CH, THs, W) f32, channel-major (dense per-channel slabs):
        ch 0: row-pair |luma diff|, max over groups of `stride` rows
        ch 1: col-pair |luma diff| (valid at even columns, 0 elsewhere),
              max over groups of `stride` rows
        ch 2: (1 - alpha), max over groups of `stride` rows (only if C > 3)
    The max over groups of `stride` columns happens in the wrapper.
    """
    f32 = jnp.float32
    THs = TH // stride

    r = gt_ref[0, 0].astype(f32)
    g = gt_ref[0, 1].astype(f32)
    b = gt_ref[0, 2].astype(f32)
    luma = 0.299 * r + 0.587 * g + 0.114 * b                       # (TH, W)

    # Pair diffs with one roll per axis + an even-index parity mask.
    # pltpu.roll follows jnp.roll semantics, so roll(x, n-1)[i] == x[(i+1) % n]:
    # even positions hold |x[2k] - x[2k+1]|; odd positions (including the
    # wrap-around row/column, which is odd since TH and W are even) hold
    # cross-pair values and are zeroed.  |diff| >= 0, so zeros never affect
    # the subsequent max-pools.
    row_even = jax.lax.broadcasted_iota(jnp.int32, (TH, W), 0) % 2 == 0
    col_even = jax.lax.broadcasted_iota(jnp.int32, (TH, W), 1) % 2 == 0
    dx = jnp.where(row_even, jnp.abs(luma - pltpu.roll(luma, TH - 1, axis=0)), 0.0)
    dy = jnp.where(col_even, jnp.abs(luma - pltpu.roll(luma, W - 1, axis=1)), 0.0)

    def row_pool(v):
        # (TH, W) -> max over non-overlapping groups of `stride` rows -> (THs, W).
        # stride (=16) is a multiple of the 8-row sublane tile, so the reshape
        # only splits the major axis on a tile boundary (layout-preserving);
        # the reduction is a plain sublane-group max.  No scratch, no strided
        # sublane reads, no extra vector stores.
        return jnp.max(v.reshape(THs, stride, W), axis=1)

    out_ref[0, 0] = row_pool(dx)
    out_ref[0, 1] = row_pool(dy)
    if CH > 2:
        out_ref[0, 2] = row_pool(1.0 - gt_ref[0, 3].astype(f32))


def _vmem_need_bytes(TH, W, C, CH, stride, itemsize):
    THs = TH // stride
    return (2 * C * TH * W * itemsize        # double-buffered input block
            + 2 * CH * THs * W * 4           # double-buffered output block
            + 6 * TH * W * 4)                # live f32 temporaries (luma/diffs/masks)


def _choose_tile_h(H, W, C, CH, stride, itemsize, budget_bytes, prefer_multi_step):
    """Largest row tile that divides H, is a multiple of `stride`, keeps the
    output tile sublane-dense (THs % 8 == 0 unless the tile is the whole
    image), and fits the VMEM budget.  If `prefer_multi_step` (batch == 1),
    prefer a tile giving >=2 grid steps so both v7x TensorCores get work."""
    Hs = H // stride
    cands = []
    for t in range(1, Hs + 1):
        if Hs % t:
            continue
        TH = t * stride
        if TH != H and t % 8 != 0:
            continue
        cands.append(TH)
    fitting = [TH for TH in cands
               if _vmem_need_bytes(TH, W, C, CH, stride, itemsize) <= budget_bytes]
    if not fitting:
        return min(cands)
    if prefer_multi_step:
        multi = [TH for TH in fitting if H // TH >= 2]
        if multi:
            return max(multi)
    return max(fitting)


def yang_forward(gt, stride=16, tile_h=None):
    N, C, H, W = gt.shape
    assert C >= 3, "Yang expects at least RGB channels"
    assert stride % 2 == 0 and H % stride == 0 and W % stride == 0
    Hs, Ws = H // stride, W // stride
    CH = 3 if C > 3 else 2                     # C==3: no mask plane emitted
    itemsize = jnp.dtype(gt.dtype).itemsize

    # Generation-aware VMEM plan (128 MiB on v5e/v6e, 64 MiB per core on v7x).
    try:
        vmem_cap = int(pltpu.get_tpu_info().vmem_capacity_bytes)
    except Exception:
        vmem_cap = 64 * 1024 * 1024            # conservative fallback
    budget = int(0.70 * vmem_cap)

    if tile_h is None:
        TH = _choose_tile_h(H, W, C, CH, stride, itemsize, budget,
                            prefer_multi_step=(N == 1))
    else:
        TH = tile_h
    assert H % TH == 0 and TH % stride == 0
    assert TH == H or (TH // stride) % 8 == 0, "output tile must stay sublane-dense"
    THs = TH // stride

    need = _vmem_need_bytes(TH, W, C, CH, stride, itemsize)
    vmem_limit = int(min(0.9 * vmem_cap, max(need + (16 << 20), 32 << 20)))

    kernel = functools.partial(_yang_kernel, C=C, CH=CH, TH=TH, W=W, stride=stride)
    rowred = pl.pallas_call(
        kernel,
        out_shape=jax.ShapeDtypeStruct((N, CH, Hs, W), jnp.float32),
        grid_spec=pltpu.PrefetchScalarGridSpec(
            num_scalar_prefetch=0,
            grid=(N, H // TH),
            # NOTE: if DMA ever shows up exposed at small TH, this input spec is
            # the place to sweep pipeline_mode=pl.Buffered(3).
            in_specs=[pl.BlockSpec((1, C, TH, W), lambda n, h: (n, 0, h, 0))],
            out_specs=pl.BlockSpec((1, CH, THs, W), lambda n, h: (n, 0, h, 0)),
        ),
        compiler_params=pltpu.CompilerParams(
            dimension_semantics=("parallel", "parallel"),
            vmem_limit_bytes=vmem_limit,
        ),
    )(gt)

    # Tiny pooled-row epilogue in plain XLA: max over lane groups of `stride`
    # columns, mask add with PyTorch broadcast semantics, channel concat.
    pooled = rowred.reshape(N, CH, Hs, Ws, stride).max(axis=-1)    # (N, CH, Hs, Ws)
    xpool = pooled[:, 0]
    ypool = pooled[:, 1]
    if C > 3:
        maskp = pooled[:, 2]                                       # (N, Hs, Ws)
        # torch: (N,1,Hs,Ws) + (N,Hs,Ws) broadcasts to (N,N,Hs,Ws)
        x = xpool[:, None] + maskp
        y = ypool[:, None] + maskp
    else:
        x = xpool[:, None]
        y = ypool[:, None]
    return jnp.concatenate((x, y), axis=1)                         # float32, like torch


# ------------------ pure-JAX reference (mirrors the PyTorch code) -------------
def _pool_max(a, kh, kw):
    *lead, Hh, Ww = a.shape
    a = a.reshape(*lead, Hh // kh, kh, Ww // kw, kw)
    return a.max(axis=(-3, -1))


def yang_reference(gt, stride=16):
    gt = gt.astype(jnp.float32)
    N, C, H, W = gt.shape
    luma = (0.299 * gt[:, 0] + 0.587 * gt[:, 1] + 0.114 * gt[:, 2])[:, None]
    if C > 3:
        mask = _pool_max(1.0 - gt[:, 3], stride, stride)            # (N, Hs, Ws)
    else:
        mask = jnp.zeros((N, 1, H // stride, W // stride), jnp.float32)
    x = jnp.abs(luma[..., 0::2, :] - luma[..., 1::2, :])
    x = _pool_max(x, stride // 2, stride) + mask
    y = jnp.abs(luma[..., 0::2] - luma[..., 1::2])
    y = _pool_max(y, stride, stride // 2) + mask
    return jnp.concatenate((x, y), axis=1)


if __name__ == "__main__":
    key = jax.random.PRNGKey(0)
    k1, k2, k3 = jax.random.split(key, 3)

    # RGBA, batch=2, 32x32 (stride 16 -> 2x2 pooled grid), one row-tile per image.
    gt_rgba = jax.random.uniform(k1, (2, 4, 32, 32), dtype=jnp.float32)
    # RGBA, batch=1, 256x128: exercises row tiling (2 row-tiles, THs=8 sublane-dense).
    gt_tall = jax.random.uniform(k2, (1, 4, 256, 128), dtype=jnp.float32)
    # RGB (no alpha channel -> 2-channel kernel output, zero-mask path).
    gt_rgb = jax.random.uniform(k3, (2, 3, 32, 32), dtype=jnp.float32)

    for gt in (gt_rgba, gt_tall, gt_rgb):
        out = jax.block_until_ready(yang_forward(gt, stride=16))
        ref = yang_reference(gt, stride=16)
        assert out.shape == ref.shape, (out.shape, ref.shape)
        assert out.dtype == jnp.float32
        assert jnp.allclose(out, ref, rtol=1e-5, atol=1e-5), float(
            jnp.max(jnp.abs(out - ref)))
    print("KERNEL_OK")
</pallas_src>

<mosaic_0001>
module attributes {stable_mosaic.version = 11 : i64} {
  func.func @_yang_kernel(%arg0: i32, %arg1: i32, %arg2: memref<1x4x32x32xf32, #tpu.memory_space<vmem>>, %arg3: memref<1x3x2x32xf32, #tpu.memory_space<vmem>>) attributes {dimension_semantics = [#tpu.dimension_semantics<parallel>, #tpu.dimension_semantics<parallel>], iteration_bounds = array<i64: 2, 1>, scalar_prefetch = 0 : i64, scratch_operands = 0 : i64, tpu.core_type = #tpu.core_type<tc>, window_params = [{transform_indices = @transform_0, window_bounds = array<i64: 1, 4, 32, 32>}, {transform_indices = @transform_1, window_bounds = array<i64: 1, 3, 2, 32>}]} {
    %c0 = arith.constant 0 : index
    %c0_0 = arith.constant 0 : index
    %c0_1 = arith.constant 0 : index
    %c0_2 = arith.constant 0 : index
    %0 = vector.load %arg2[%c0, %c0_0, %c0_1, %c0_2] : memref<1x4x32x32xf32, #tpu.memory_space<vmem>>, vector<1x1x32x32xf32>
    %1 = vector.shape_cast %0 : vector<1x1x32x32xf32> to vector<32x32xf32>
    %c0_3 = arith.constant 0 : index
    %c1 = arith.constant 1 : index
    %c0_4 = arith.constant 0 : index
    %c0_5 = arith.constant 0 : index
    %2 = vector.load %arg2[%c0_3, %c1, %c0_4, %c0_5] : memref<1x4x32x32xf32, #tpu.memory_space<vmem>>, vector<1x1x32x32xf32>
    %3 = vector.shape_cast %2 : vector<1x1x32x32xf32> to vector<32x32xf32>
    %c0_6 = arith.constant 0 : index
    %c2 = arith.constant 2 : index
    %c0_7 = arith.constant 0 : index
    %c0_8 = arith.constant 0 : index
    %4 = vector.load %arg2[%c0_6, %c2, %c0_7, %c0_8] : memref<1x4x32x32xf32, #tpu.memory_space<vmem>>, vector<1x1x32x32xf32>
    %5 = vector.shape_cast %4 : vector<1x1x32x32xf32> to vector<32x32xf32>
    %cst = arith.constant 2.990000e-01 : f32
    %6 = vector.broadcast %cst : f32 to vector<32x32xf32>
    %7 = arith.mulf %6, %1 : vector<32x32xf32>
    %cst_9 = arith.constant 5.870000e-01 : f32
    %8 = vector.broadcast %cst_9 : f32 to vector<32x32xf32>
    %9 = arith.mulf %8, %3 : vector<32x32xf32>
    %10 = arith.addf %7, %9 : vector<32x32xf32>
    %cst_10 = arith.constant 1.140000e-01 : f32
    %11 = vector.broadcast %cst_10 : f32 to vector<32x32xf32>
    %12 = arith.mulf %11, %5 : vector<32x32xf32>
    %13 = arith.addf %10, %12 : vector<32x32xf32>
    %14 = tpu.iota {dimensions = array<i32: 0>} : vector<32x32xi32>
    %c2_i32 = arith.constant 2 : i32
    %c0_i32 = arith.constant 0 : i32
    %15 = arith.cmpi eq, %c2_i32, %c0_i32 : i32
    %c1_i32 = arith.constant 1 : i32
    %16 = arith.select %15, %c1_i32, %c2_i32 : i32
    %17 = vector.broadcast %16 : i32 to vector<32x32xi32>
    %18 = arith.remsi %14, %17 : vector<32x32xi32>
    %c0_i32_11 = arith.constant 0 : i32
    %19 = vector.broadcast %c0_i32_11 : i32 to vector<32x32xi32>
    %20 = arith.cmpi ne, %18, %19 : vector<32x32xi32>
    %c0_i32_12 = arith.constant 0 : i32
    %21 = vector.broadcast %c0_i32_12 : i32 to vector<32x32xi32>
    %22 = arith.cmpi slt, %18, %21 : vector<32x32xi32>
    %c0_i32_13 = arith.constant 0 : i32
    %23 = arith.cmpi slt, %16, %c0_i32_13 : i32
    %24 = vector.broadcast %23 : i1 to vector<32x32xi1>
    %25 = vector.broadcast %24 : vector<32x32xi1> to vector<32x32xi1>
    %26 = arith.xori %22, %25 : vector<32x32xi1>
    %27 = arith.andi %26, %20 : vector<32x32xi1>
    %28 = vector.broadcast %16 : i32 to vector<32x32xi32>
    %29 = arith.addi %18, %28 : vector<32x32xi32>
    %30 = arith.select %27, %29, %18 : vector<32x32xi1>, vector<32x32xi32>
    %c0_i32_14 = arith.constant 0 : i32
    %31 = vector.broadcast %c0_i32_14 : i32 to vector<32x32xi32>
    %32 = arith.cmpi eq, %30, %31 : vector<32x32xi32>
    %33 = tpu.iota {dimensions = array<i32: 1>} : vector<32x32xi32>
    %c2_i32_15 = arith.constant 2 : i32
    %c0_i32_16 = arith.constant 0 : i32
    %34 = arith.cmpi eq, %c2_i32_15, %c0_i32_16 : i32
    %c1_i32_17 = arith.constant 1 : i32
    %35 = arith.select %34, %c1_i32_17, %c2_i32_15 : i32
    %36 = vector.broadcast %35 : i32 to vector<32x32xi32>
    %37 = arith.remsi %33, %36 : vector<32x32xi32>
    %c0_i32_18 = arith.constant 0 : i32
    %38 = vector.broadcast %c0_i32_18 : i32 to vector<32x32xi32>
    %39 = arith.cmpi ne, %37, %38 : vector<32x32xi32>
    %c0_i32_19 = arith.constant 0 : i32
    %40 = vector.broadcast %c0_i32_19 : i32 to vector<32x32xi32>
    %41 = arith.cmpi slt, %37, %40 : vector<32x32xi32>
    %c0_i32_20 = arith.constant 0 : i32
    %42 = arith.cmpi slt, %35, %c0_i32_20 : i32
    %43 = vector.broadcast %42 : i1 to vector<32x32xi1>
    %44 = vector.broadcast %43 : vector<32x32xi1> to vector<32x32xi1>
    %45 = arith.xori %41, %44 : vector<32x32xi1>
    %46 = arith.andi %45, %39 : vector<32x32xi1>
    %47 = vector.broadcast %35 : i32 to vector<32x32xi32>
    %48 = arith.addi %37, %47 : vector<32x32xi32>
    %49 = arith.select %46, %48, %37 : vector<32x32xi1>, vector<32x32xi32>
    %c0_i32_21 = arith.constant 0 : i32
    %50 = vector.broadcast %c0_i32_21 : i32 to vector<32x32xi32>
    %51 = arith.cmpi eq, %49, %50 : vector<32x32xi32>
    %c31_i32 = arith.constant 31 : i32
    %52 = tpu.dynamic_rotate %13 by %c31_i32 dim 0 : vector<32x32xf32>, i32 -> vector<32x32xf32>
    %53 = arith.subf %13, %52 : vector<32x32xf32>
    %54 = math.absf %53 : vector<32x32xf32>
    %cst_22 = arith.constant 0.000000e+00 : f32
    %55 = vector.broadcast %cst_22 : f32 to vector<32x32xf32>
    %56 = arith.select %32, %54, %55 : vector<32x32xi1>, vector<32x32xf32>
    %c31_i32_23 = arith.constant 31 : i32
    %57 = tpu.dynamic_rotate %13 by %c31_i32_23 dim 1 : vector<32x32xf32>, i32 -> vector<32x32xf32>
    %58 = arith.subf %13, %57 : vector<32x32xf32>
    %59 = math.absf %58 : vector<32x32xf32>
    %cst_24 = arith.constant 0.000000e+00 : f32
    %60 = vector.broadcast %cst_24 : f32 to vector<32x32xf32>
    %61 = arith.select %51, %59, %60 : vector<32x32xi1>, vector<32x32xf32>
    %62 = vector.shape_cast %56 : vector<32x32xf32> to vector<2x16x32xf32>
    %cst_25 = arith.constant dense<0xFF800000> : vector<2x32xf32>
    %63 = vector.multi_reduction <maximumf>, %62, %cst_25 [1] : vector<2x16x32xf32> to vector<2x32xf32>
    %c0_26 = arith.constant 0 : index
    %c0_27 = arith.constant 0 : index
    %c0_28 = arith.constant 0 : index
    %c0_29 = arith.constant 0 : index
    %64 = vector.load %arg3[%c0_26, %c0_27, %c0_28, %c0_29] : memref<1x3x2x32xf32, #tpu.memory_space<vmem>>, vector<1x1x2x32xf32>
    %65 = vector.shape_cast %64 : vector<1x1x2x32xf32> to vector<2x32xf32>
    %66 = vector.shape_cast %63 : vector<2x32xf32> to vector<1x1x2x32xf32>
    tpu.vector_store %arg3[%c0_26, %c0_27, %c0_28, %c0_29], %66 {strides = array<i32>} : memref<1x3x2x32xf32, #tpu.memory_space<vmem>>, vector<1x1x2x32xf32>,
    %67 = vector.shape_cast %61 : vector<32x32xf32> to vector<2x16x32xf32>
    %cst_30 = arith.constant dense<0xFF800000> : vector<2x32xf32>
    %68 = vector.multi_reduction <maximumf>, %67, %cst_30 [1] : vector<2x16x32xf32> to vector<2x32xf32>
    %c0_31 = arith.constant 0 : index
    %c1_32 = arith.constant 1 : index
    %c0_33 = arith.constant 0 : index
    %c0_34 = arith.constant 0 : index
    %69 = vector.load %arg3[%c0_31, %c1_32, %c0_33, %c0_34] : memref<1x3x2x32xf32, #tpu.memory_space<vmem>>, vector<1x1x2x32xf32>
    %70 = vector.shape_cast %69 : vector<1x1x2x32xf32> to vector<2x32xf32>
    %71 = vector.shape_cast %68 : vector<2x32xf32> to vector<1x1x2x32xf32>
    tpu.vector_store %arg3[%c0_31, %c1_32, %c0_33, %c0_34], %71 {strides = array<i32>} : memref<1x3x2x32xf32, #tpu.memory_space<vmem>>, vector<1x1x2x32xf32>,
    %c0_35 = arith.constant 0 : index
    %c3 = arith.constant 3 : index
    %c0_36 = arith.constant 0 : index
    %c0_37 = arith.constant 0 : index
    %72 = vector.load %arg2[%c0_35, %c3, %c0_36, %c0_37] : memref<1x4x32x32xf32, #tpu.memory_space<vmem>>, vector<1x1x32x32xf32>
    %73 = vector.shape_cast %72 : vector<1x1x32x32xf32> to vector<32x32xf32>
    %cst_38 = arith.constant 1.000000e+00 : f32
    %74 = vector.broadcast %cst_38 : f32 to vector<32x32xf32>
    %75 = arith.subf %74, %73 : vector<32x32xf32>
    %76 = vector.shape_cast %75 : vector<32x32xf32> to vector<2x16x32xf32>
    %cst_39 = arith.constant dense<0xFF800000> : vector<2x32xf32>
    %77 = vector.multi_reduction <maximumf>, %76, %cst_39 [1] : vector<2x16x32xf32> to vector<2x32xf32>
    %c0_40 = arith.constant 0 : index
    %c2_41 = arith.constant 2 : index
    %c0_42 = arith.constant 0 : index
    %c0_43 = arith.constant 0 : index
    %78 = vector.load %arg3[%c0_40, %c2_41, %c0_42, %c0_43] : memref<1x3x2x32xf32, #tpu.memory_space<vmem>>, vector<1x1x2x32xf32>
    %79 = vector.shape_cast %78 : vector<1x1x2x32xf32> to vector<2x32xf32>
    %80 = vector.shape_cast %77 : vector<2x32xf32> to vector<1x1x2x32xf32>
    tpu.vector_store %arg3[%c0_40, %c2_41, %c0_42, %c0_43], %80 {strides = array<i32>} : memref<1x3x2x32xf32, #tpu.memory_space<vmem>>, vector<1x1x2x32xf32>,
    return
  }
  func.func @transform_0(%arg0: i32, %arg1: i32) -> (i32, i32, i32, i32) {
    %c0_i32 = arith.constant 0 : i32
    %c0_i32_0 = arith.constant 0 : i32
    %c0_i32_1 = arith.constant 0 : i32
    return %arg0, %c0_i32, %arg1, %c0_i32_0 : i32, i32, i32, i32
  }
  func.func @transform_1(%arg0: i32, %arg1: i32) -> (i32, i32, i32, i32) {
    %c0_i32 = arith.constant 0 : i32
    %c0_i32_0 = arith.constant 0 : i32
    %c0_i32_1 = arith.constant 0 : i32
    return %arg0, %c0_i32, %arg1, %c0_i32_0 : i32, i32, i32, i32
  }
}

</mosaic_0001>

<llo_original>
// kernel: tpu_custom_call.1
$region0: #{tpu_custom_call.1}
  #allocation0 [shape = 'u32[]', space=smem, size = 0x4, offset = 0x4, fixed_abs, tag = 'smem constant byte address 0x4 - core index']
  #allocation1 [shape = 'u32[144,128]{1,0:T(1,128)}', space=vmem, size = 0x12000, scoped, tag = 'internal scratch']
  %s0 = inlined_call_operand.hbm [shape: f32[2,4,32,32], index: 0, kind: input, shape index: {}]
  %s1 = inlined_call_operand.hbm [shape: f32[2,3,2,32], index: 1, kind: output, shape index: {}]
  %s2 = sld [smem:[#allocation0]]
  $region41: #{tpu_custom_call.1} parent=0
    _
  %s4 = ssub.s32 1, %s2
  %s5 = scalar_select 0, %s4, %s2
  $region1: #{tpu_custom_call.1} parent=0
    #allocation2 [shape = 'u8[131072]{0}', space=vmem, size = 0x20000, scoped, tag = 'input window, operand 0']
    #allocation3 [shape = 's32[2]{0}', space=sflag, size = 0x8, scoped, tag = 'scoped memory for tpu_custom_call.1']
    #allocation4 [shape = 's32[2]{0}', space=sflag, size = 0x8, scoped, tag = 'scoped memory for tpu_custom_call.1']
    #allocation5 [shape = 'u8[6144]{0}', space=vmem, size = 0x1800, scoped, tag = 'output window, operand 0']
    %6 = vsyncpa [#allocation3], 0
    %s7 = scalar_lea.sflag [#allocation3], 1
    %8 = vsyncpa %s7, 0
    %9 = vsyncpa [#allocation4], 0
    %s10 = scalar_lea.sflag [#allocation4], 1
    %11 = vsyncpa %s10, 0
    loop: start=0, step=1, limit=4
    $region2: #{tpu_custom_call.1} parent=1 // loop_pre_header
      _
    $region3: #{tpu_custom_call.1} parent=1 // loop_header
      %s13 = sphi 0, %s17
      %p14 = scmp.ge.s32.totalorder %s13, 4
      %s20 = sphi 0, %s32
      %s21 = sphi 0, %s28
      %s22 = sphi 0, %s20
      %s23 = sphi 0, %s21
      %s24 = sphi 0, %s22
      %s25 = sphi 0, %s23
      %s37 = sphi 0, %s39
      %s40 = sphi 0, %s37
      %s41 = sphi 0, %s40
      %s57 = sphi 0, %s41
      %s65 = sphi 0, %s67
      %s68 = sphi 0, %s65
      %s69 = sphi 0, %s68
      %s85 = sphi 0, %s69
    $region4: #{tpu_custom_call.1} parent=1 // loop_header_branch
      %16 = sbr.rel (%p14) target = $region8
    $region5: #{tpu_custom_call.1} parent=1 // loop_body
      %s18 = ssub.s32 %s13, 1
      %s19 = ssub.s32 %s13, 2
      %s26 = sadd.s32 1, %s21
      %p27 = scmp.ge.s32.totalorder %s26, 1
      %s28 = scalar_select %p27, 0, %s26
      %s29 = sadd.s32 1, %s20
      %s30 = scalar_select %p27, %s29, %s20
      %p31 = scmp.ge.s32.totalorder %s30, 2
      %s32 = scalar_select %p31, 0, %s30
      %s33 = ssub.s32 %s20, %s32
      %s34 = ssub.s32 %s21, %s28
      %s35 = sor.u32 %s33, %s34
      %p36 = scmp.eq.s32.totalorder %s35, 0
      %s38 = sadd.s32 %s37, 1
      %s39 = scalar_select %p36, %s37, %s38
      %p42 = pneg %p36
      %p43 = scmp.eq.s32.totalorder %s13, 1
      %p44 = por %p42, %p43
      %p45 = scmp.ne.s32.totalorder %s37, %s40
      %p46 = scmp.eq.s32.totalorder %s13, 0
      %p47 = por %p45, %p46
      %p48 = scmp.ne.s32.totalorder %s37, %s40
      %p49 = scmp.eq.s32.totalorder %s18, 1
      %p50 = por %p48, %p49
      %p51 = scmp.ne.s32.totalorder %s40, %s41
      %p52 = scmp.eq.s32.totalorder %s18, 0
      %p53 = por %p51, %p52
      %p54 = scmp.ne.s32.totalorder %s40, %s41
      %p55 = scmp.eq.s32.totalorder %s19, 1
      %p56 = por %p54, %p55
      %p58 = scmp.ne.s32.totalorder %s41, %s57
      %p59 = scmp.eq.s32.totalorder %s19, 0
      %p60 = por %p58, %p59
      %s61 = ssub.s32 %s20, %s32
      %s62 = ssub.s32 %s21, %s28
      %s63 = sor.u32 %s61, %s62
      %p64 = scmp.eq.s32.totalorder %s63, 0
      %s66 = sadd.s32 %s65, 1
      %s67 = scalar_select %p64, %s65, %s66
      %p70 = pneg %p64
      %p71 = scmp.eq.s32.totalorder %s13, 1
      %p72 = por %p70, %p71
      %p73 = scmp.ne.s32.totalorder %s65, %s68
      %p74 = scmp.eq.s32.totalorder %s13, 0
      %p75 = por %p73, %p74
      %p76 = scmp.ne.s32.totalorder %s65, %s68
      %p77 = scmp.eq.s32.totalorder %s18, 1
      %p78 = por %p76, %p77
      %p79 = scmp.ne.s32.totalorder %s68, %s69
      %p80 = scmp.eq.s32.totalorder %s18, 0
      %p81 = por %p79, %p80
      %p82 = scmp.ne.s32.totalorder %s68, %s69
      %p83 = scmp.eq.s32.totalorder %s19, 1
      %p84 = por %p82, %p83
      %p86 = scmp.ne.s32.totalorder %s69, %s85
      %p87 = scmp.eq.s32.totalorder %s19, 0
      %p88 = por %p86, %p87
      %p89 = scmp.le.s32.totalorder 1, %s13
      %p90 = scmp.lt.s32.totalorder %s13, 3
      %p91 = pnand %p89, %p90
      %p92 = pneg %p91
      // Predicated region
      $region9: #{tpu_custom_call.1} parent=5 // pred_check
        _
      $region10: #{tpu_custom_call.1} parent=5 // pred_check_branch
        %94 = sbr.rel (%p91) target = $region12
      $region11: #{tpu_custom_call.1} parent=5 // pred_region
        %s95 = ssub.s32 %s13, 1
      $region12: #{tpu_custom_call.1} parent=5 // pred_fallthru
        _
      %p96 = scmp.lt.s32.totalorder %s13, 2
      // Predicated region
      $region13: #{tpu_custom_call.1} parent=5 // pred_check
        %p97 = pneg %p96
      $region14: #{tpu_custom_call.1} parent=5 // pred_check_branch
        %99 = sbr.rel (%p97) target = $region16
      $region15: #{tpu_custom_call.1} parent=5 // pred_region
        // Predicated region
        $region17: #{tpu_custom_call.1} parent=15 // pred_check
          %p100 = pneg %p47
        $region18: #{tpu_custom_call.1} parent=15 // pred_check_branch
          %102 = sbr.rel (%p100) target = $region20
        $region19: #{tpu_custom_call.1} parent=15 // pred_region
          %s103 = sand.u32 %s37, 1
          %s104 = scalar_lea.sflag [#allocation3], %s103
          %s105 = sand.u32 %s37, 1
          %s106 = smul.addr %s105, 128
          %s107 = scalar_lea.vmem [#allocation2], %s106
          %s108 = smul.u32 4, %s21
          %s110 = ssub.s32 2048, 2048
          %111 = vsyncadd %s104, %s110
          %s112 = smul.addr %s20, 16
          %s113 = sadd.s32 %s108, %s112
          %s114 = smul.addr %s113, 128
          %s115 = scalar_lea.hbm %s0, %s114
          %s116 = sshll.u32 %s107, 4
          %s117 = int_to_ptr.vmem [resolvable:$true] %s116
          %122 = dma.hbm_to_vmem [thread:$0]  %s115, 2048, %s117, %s104, 128, 128, 8
        $region20: #{tpu_custom_call.1} parent=15 // pred_fallthru
          _
      $region16: #{tpu_custom_call.1} parent=5 // pred_fallthru
        _
      %p123 = scmp.le.s32.totalorder 1, %s13
      %p124 = scmp.lt.s32.totalorder %s13, 3
      %p125 = pnand %p123, %p124
      %p126 = pneg %p125
      // Predicated region
      $region21: #{tpu_custom_call.1} parent=5 // pred_check
        _
      $region22: #{tpu_custom_call.1} parent=5 // pred_check_branch
        %128 = sbr.rel (%p125) target = $region24
      $region23: #{tpu_custom_call.1} parent=5 // pred_region
        %s129 = ssub.s32 %s13, 1
        %s130 = sand.u32 %s40, 1
        %s131 = scalar_lea.sflag [#allocation3], %s130
        %s132 = sand.u32 %s40, 1
        %s133 = smul.addr %s132, 128
        %s134 = scalar_lea.vmem [#allocation2], %s133
        // Predicated region
        $region25: #{tpu_custom_call.1} parent=23 // pred_check
          %p135 = pneg %p53
        $region26: #{tpu_custom_call.1} parent=23 // pred_check_branch
          %137 = sbr.rel (%p135) target = $region28
        $region27: #{tpu_custom_call.1} parent=23 // pred_region
          %138 = dma.done %s131, 2048
        $region28: #{tpu_custom_call.1} parent=23 // pred_fallthru
          _
        %s139 = sand.u32 %s40, 1
        %s140 = scalar_lea.sflag [#allocation3], %s139
        %s141 = sand.u32 %s40, 1
        %s142 = smul.addr %s141, 128
        %s143 = scalar_lea.vmem [#allocation2], %s142
        %p144 = pneg %p53
        %p145 = pneg %p50
        %p146 = pneg %p81
        %p147 = pneg %p78
        %s148 = sand.u32 %s68, 1
        %s149 = scalar_lea.sflag [#allocation4], %s148
        %s150 = sand.u32 %s68, 1
        %s151 = smul.addr %s150, 6
        %s152 = scalar_lea.vmem [#allocation5], %s151
        %s153 = smul.u32 4, %s23
        %v154 = vld [vmem:[%s134] sm:$0xff]
        %v155 = vld [vmem:[%s134 + $0x8] sm:$0xff]
        %v156 = vld [vmem:[%s134 + $0x10] sm:$0xff]
        %v157 = vld [vmem:[%s134 + $0x18] sm:$0xff]
        %s158 = scalar_lea.vmem %s134, 32 [#allocation2]
        %v159 = vld [vmem:[%s158] sm:$0xff]
        %v160 = vld [vmem:[%s158 + $0x8] sm:$0xff]
        %v161 = vld [vmem:[%s158 + $0x10] sm:$0xff]
        %v162 = vld [vmem:[%s158 + $0x18] sm:$0xff]
        %s163 = scalar_lea.vmem %s134, 64 [#allocation2]
        %v164 = vld [vmem:[%s163] sm:$0xff]
        %v165 = vld [vmem:[%s163 + $0x8] sm:$0xff]
        %v166 = vld [vmem:[%s163 + $0x10] sm:$0xff]
        %v167 = vld [vmem:[%s163 + $0x18] sm:$0xff]
        %v168 = vmul.f32 %v154, 0.299
        %v169 = vmul.f32 %v155, 0.299
        %v170 = vmul.f32 %v156, 0.299
        %v171 = vmul.f32 %v157, 0.299
        %v172 = vmul.f32 %v159, 0.587
        %v173 = vmul.f32 %v160, 0.587
        %v174 = vmul.f32 %v161, 0.587
        %v175 = vmul.f32 %v162, 0.587
        %v176 = vadd.f32 %v168, %v172
        %v177 = vadd.f32 %v169, %v173
        %v178 = vadd.f32 %v170, %v174
        %v179 = vadd.f32 %v171, %v175
        %v180 = vmul.f32 %v164, 0.114
        %v181 = vmul.f32 %v165, 0.114
        %v182 = vmul.f32 %v166, 0.114
        %v183 = vmul.f32 %v167, 0.114
        %v184 = vadd.f32 %v176, %v180
        %v185 = vadd.f32 %v177, %v181
        %v186 = vadd.f32 %v178, %v182
        %v187 = vadd.f32 %v179, %v183
        %v188 = vlaneseq
        %v189 = vshrl.u32 %v188, 7
        %v190 = vadd.s32 %v189, 8
        %v191 = vadd.s32 %v189, 16
        %v192 = vadd.s32 %v189, 24
        %vm193 = vcmp.lt.s32.totalorder %v189, 0
        %v194 = vsub.s32 0, %v189
        %v195 = vsel %vm193, %v194, %v189
        %v196 = vshrl.u32 %v195, 1
        %v197 = vand.u32 %v195, 1
        %v198 = vsub.s32 0, %v197
        %v199 = vsel %vm193, %v198, %v197
        %vm200 = vcmp.lt.s32.totalorder %v190, 0
        %v201 = vsub.s32 0, %v190
        %v202 = vsel %vm200, %v201, %v190
        %v203 = vshrl.u32 %v202, 1
        %v204 = vand.u32 %v202, 1
        %v205 = vsub.s32 0, %v204
        %v206 = vsel %vm200, %v205, %v204
        %vm207 = vcmp.lt.s32.totalorder %v191, 0
        %v208 = vsub.s32 0, %v191
        %v209 = vsel %vm207, %v208, %v191
        %v210 = vshrl.u32 %v209, 1
        %v211 = vand.u32 %v209, 1
        %v212 = vsub.s32 0, %v211
        %v213 = vsel %vm207, %v212, %v211
        %vm214 = vcmp.lt.s32.totalorder %v192, 0
        %v215 = vsub.s32 0, %v192
        %v216 = vsel %vm214, %v215, %v192
        %v217 = vshrl.u32 %v216, 1
        %v218 = vand.u32 %v216, 1
        %v219 = vsub.s32 0, %v218
        %v220 = vsel %vm214, %v219, %v218
        %vm221 = vcmp.ne.s32.totalorder %v199, 0
        %vm222 = vcmp.ne.s32.totalorder %v206, 0
        %vm223 = vcmp.ne.s32.totalorder %v213, 0
        %vm224 = vcmp.ne.s32.totalorder %v220, 0
        %vm225 = vcmp.lt.s32.totalorder %v199, 0
        %vm226 = vcmp.lt.s32.totalorder %v206, 0
        %vm227 = vcmp.lt.s32.totalorder %v213, 0
        %vm228 = vcmp.lt.s32.totalorder %v220, 0
        %vm229 = vmand %vm225, %vm221
        %vm230 = vmand %vm226, %vm222
        %vm231 = vmand %vm227, %vm223
        %vm232 = vmand %vm228, %vm224
        %v233 = vadd.s32 %v199, 2
        %v234 = vadd.s32 %v206, 2
        %v235 = vadd.s32 %v213, 2
        %v236 = vadd.s32 %v220, 2
        %v237 = vsel %vm229, %v233, %v199
        %v238 = vsel %vm230, %v234, %v206
        %v239 = vsel %vm231, %v235, %v213
        %v240 = vsel %vm232, %v236, %v220
        %vm241 = vcmp.eq.s32.totalorder %v237, 0
        %vm242 = vcmp.eq.s32.totalorder %v238, 0
        %vm243 = vcmp.eq.s32.totalorder %v239, 0
        %vm244 = vcmp.eq.s32.totalorder %v240, 0
        %v245 = vlaneseq
        %v246 = vand.u32 %v245, 127
        %vm247 = vcmp.lt.s32.totalorder %v246, 0
        %v248 = vsub.s32 0, %v246
        %v249 = vsel %vm247, %v248, %v246
        %v250 = vshrl.u32 %v249, 1
        %v251 = vand.u32 %v249, 1
        %v252 = vsub.s32 0, %v251
        %v253 = vsel %vm247, %v252, %v251
        %vm254 = vcmp.ne.s32.totalorder %v253, 0
        %vm255 = vcmp.lt.s32.totalorder %v253, 0
        %vm256 = vmand %vm255, %vm254
        %v257 = vadd.s32 %v253, 2
        %v258 = vsel %vm256, %v257, %v253
        %vm259 = vcmp.eq.s32.totalorder %v258, 0
        %v260 = vrot.slane %v184, 1
        %v261 = vrot.slane %v185, 1
        %v262 = vrot.slane %v186, 1
        %v263 = vrot.slane %v187, 1
        %vm264 = vcmp.lt.s32.totalorder %v189, 7
        %v265 = vsel %vm264, %v262, %v263
        %v266 = vsel %vm264, %v261, %v262
        %v267 = vsel %vm264, %v260, %v261
        %v268 = vsel %vm264, %v263, %v260
        %v269 = vsub.f32 %v184, %v267
        %v270 = vsub.f32 %v185, %v266
        %v271 = vsub.f32 %v186, %v265
        %v272 = vsub.f32 %v187, %v268
        %v273 = vand.u32 2147483647, %v269
        %v274 = vand.u32 2147483647, %v270
        %v275 = vand.u32 2147483647, %v271
        %v276 = vand.u32 2147483647, %v272
        %v277 = vsel %vm241, %v273, 0.0
        %v278 = vsel %vm242, %v274, 0.0
        %v279 = vsel %vm243, %v275, 0.0
        %v280 = vsel %vm244, %v276, 0.0
        %vm281 = vcmask 1047808
        %282 = vrot.lane.b32.xlu0 %v184, 32
        %v283 = vpop.permute.xlu0 %282
        %v284 = vsel %vm281, %v283, %v184
        %285 = vrot.lane.b32.xlu0 %v185, 32
        %v286 = vpop.permute.xlu0 %285
        %v287 = vsel %vm281, %v286, %v185
        %288 = vrot.lane.b32.xlu0 %v186, 32
        %v289 = vpop.permute.xlu0 %288
        %v290 = vsel %vm281, %v289, %v186
        %291 = vrot.lane.b32.xlu0 %v187, 32
        %v292 = vpop.permute.xlu0 %291
        %v293 = vsel %vm281, %v292, %v187
        %294 = vrot.lane.b32.xlu0 %v284, 32
        %v295 = vpop.permute.xlu0 %294
        %296 = vrot.lane.b32.xlu0 %v287, 32
        %v297 = vpop.permute.xlu0 %296
        %298 = vrot.lane.b32.xlu0 %v290, 32
        %v299 = vpop.permute.xlu0 %298
        %300 = vrot.lane.b32.xlu0 %v293, 32
        %v301 = vpop.permute.xlu0 %300
        %v302 = vsel %vm281, %v295, %v184
        %v303 = vsel %vm281, %v297, %v185
        %v304 = vsel %vm281, %v299, %v186
        %v305 = vsel %vm281, %v301, %v187
        %310 = vrot.lane.b32.xlu0 %v302, 127
        %v311 = vpop.permute.xlu0 %310
        %312 = vrot.lane.b32.xlu0 %v303, 127
        %v313 = vpop.permute.xlu0 %312
        %314 = vrot.lane.b32.xlu0 %v304, 127
        %v315 = vpop.permute.xlu0 %314
        %316 = vrot.lane.b32.xlu0 %v305, 127
        %v317 = vpop.permute.xlu0 %316
        %v322 = vsub.f32 %v184, %v311
        %v323 = vsub.f32 %v185, %v313
        %v324 = vsub.f32 %v186, %v315
        %v325 = vsub.f32 %v187, %v317
        %v326 = vand.u32 2147483647, %v322
        %v327 = vand.u32 2147483647, %v323
        %v328 = vand.u32 2147483647, %v324
        %v329 = vand.u32 2147483647, %v325
        %v330 = vsel %vm259, %v326, 0.0
        %v331 = vsel %vm259, %v327, 0.0
        %v332 = vsel %vm259, %v328, 0.0
        %v333 = vsel %vm259, %v329, 0.0
        %vm334 = vcmask 261120
        %v335 = vsel %vm334, %v277, -inf
        %v336 = vsel %vm334, %v278, -inf
        %v337 = vmax.f32 %v335, %v336
        %v338 = vrot.slane %v337, 4
        %v339 = vmax.f32 %v337, %v338
        %v340 = vrot.slane %v339, 2
        %v341 = vmax.f32 %v339, %v340
        %v342 = vrot.slane %v341, 1
        %v343 = vmax.f32 %v341, %v342
        %v344 = vsel %vm334, %v279, -inf
        %v345 = vsel %vm334, %v280, -inf
        %v346 = vmax.f32 %v344, %v345
        %v347 = vrot.slane %v346, 4
        %v348 = vmax.f32 %v346, %v347
        %v349 = vrot.slane %v348, 2
        %v350 = vmax.f32 %v348, %v349
        %v351 = vrot.slane %v350, 1
        %v352 = vmax.f32 %v350, %v351
        %vm355 = vcmask 1041409
        %v356 = vsel %vm355, %v352, %v343
        %vm358 = vcmask 254976
        %359 = vst.msk [vmem:[%s152] sm:$0x3] %vm358, %v356
        %v360 = vsel %vm334, %v330, -inf
        %v361 = vsel %vm334, %v331, -inf
        %v362 = vmax.f32 %v360, %v361
        %v363 = vrot.slane %v362, 4
        %v364 = vmax.f32 %v362, %v363
        %v365 = vrot.slane %v364, 2
        %v366 = vmax.f32 %v364, %v365
        %v367 = vrot.slane %v366, 1
        %v368 = vmax.f32 %v366, %v367
        %v369 = vsel %vm334, %v332, -inf
        %v370 = vsel %vm334, %v333, -inf
        %v371 = vmax.f32 %v369, %v370
        %v372 = vrot.slane %v371, 4
        %v373 = vmax.f32 %v371, %v372
        %v374 = vrot.slane %v373, 2
        %v375 = vmax.f32 %v373, %v374
        %v376 = vrot.slane %v375, 1
        %v377 = vmax.f32 %v375, %v376
        %v380 = vsel %vm355, %v377, %v368
        %s382 = scalar_lea.vmem %s152, 2 [#allocation5]
        %383 = vst.msk [vmem:[%s382] sm:$0x3] %vm358, %v380
        %s384 = scalar_lea.vmem %s134, 96 [#allocation2]
        %v385 = vld [vmem:[%s384] sm:$0xff]
        %v386 = vld [vmem:[%s384 + $0x8] sm:$0xff]
        %v387 = vld [vmem:[%s384 + $0x10] sm:$0xff]
        %v388 = vld [vmem:[%s384 + $0x18] sm:$0xff]
        %v389 = vsub.f32 1.0, %v385
        %v390 = vsub.f32 1.0, %v386
        %v391 = vsub.f32 1.0, %v387
        %v392 = vsub.f32 1.0, %v388
        %v393 = vsel %vm334, %v389, -inf
        %v394 = vsel %vm334, %v390, -inf
        %v395 = vmax.f32 %v393, %v394
        %v396 = vrot.slane %v395, 4
        %v397 = vmax.f32 %v395, %v396
        %v398 = vrot.slane %v397, 2
        %v399 = vmax.f32 %v397, %v398
        %v400 = vrot.slane %v399, 1
        %v401 = vmax.f32 %v399, %v400
        %v402 = vsel %vm334, %v391, -inf
        %v403 = vsel %vm334, %v392, -inf
        %v404 = vmax.f32 %v402, %v403
        %v405 = vrot.slane %v404, 4
        %v406 = vmax.f32 %v404, %v405
        %v407 = vrot.slane %v406, 2
        %v408 = vmax.f32 %v406, %v407
        %v409 = vrot.slane %v408, 1
        %v410 = vmax.f32 %v408, %v409
        %v413 = vsel %vm355, %v410, %v401
        %s415 = scalar_lea.vmem %s152, 4 [#allocation5]
        %416 = vst.msk [vmem:[%s415] sm:$0x3] %vm358, %v413
        %s417 = sand.u32 %s68, 1
        %s418 = scalar_lea.sflag [#allocation4], %s417
        %s419 = sand.u32 %s68, 1
        %s420 = smul.addr %s419, 6
        %s421 = scalar_lea.vmem [#allocation5], %s420
        // Predicated region
        $region29: #{tpu_custom_call.1} parent=23 // pred_check
          %p422 = pneg %p78
        $region30: #{tpu_custom_call.1} parent=23 // pred_check_branch
          %424 = sbr.rel (%p422) target = $region32
        $region31: #{tpu_custom_call.1} parent=23 // pred_region
          %s426 = ssub.s32 96, 96
          %427 = vsyncadd %s418, %s426
          %s428 = smul.addr %s22, 3
          %s429 = sadd.s32 %s23, %s428
          %s430 = smul.addr %s429, 32
          %s431 = scalar_lea.hbm %s1, %s430
          %s432 = sshll.u32 %s421, 4
          %s433 = int_to_ptr.vmem [resolvable:$true] %s432
          %438 = dma.vmem_to_hbm [thread:$0]  %s433, 96, %s431, %s418, 32, 32, 2
        $region32: #{tpu_custom_call.1} parent=23 // pred_fallthru
          _
      $region24: #{tpu_custom_call.1} parent=5 // pred_fallthru
        _
      %p439 = scmp.le.s32.totalorder 2, %s13
      // Predicated region
      $region33: #{tpu_custom_call.1} parent=5 // pred_check
        %p440 = pneg %p439
      $region34: #{tpu_custom_call.1} parent=5 // pred_check_branch
        %442 = sbr.rel (%p440) target = $region36
      $region35: #{tpu_custom_call.1} parent=5 // pred_region
        %s443 = ssub.s32 %s13, 2
        // Predicated region
        $region37: #{tpu_custom_call.1} parent=35 // pred_check
          %p444 = pneg %p84
        $region38: #{tpu_custom_call.1} parent=35 // pred_check_branch
          %446 = sbr.rel (%p444) target = $region40
        $region39: #{tpu_custom_call.1} parent=35 // pred_region
          %s447 = sand.u32 %s69, 1
          %s448 = scalar_lea.sflag [#allocation4], %s447
          %s449 = sand.u32 %s69, 1
          %s450 = smul.addr %s449, 6
          %s451 = scalar_lea.vmem [#allocation5], %s450
          %452 = dma.done %s448, 96
        $region40: #{tpu_custom_call.1} parent=35 // pred_fallthru
          _
      $region36: #{tpu_custom_call.1} parent=5 // pred_fallthru
        _
    $region6: #{tpu_custom_call.1} parent=1 // loop_footer
      %s17 = sadd.s32 1, %s13
    $region7: #{tpu_custom_call.1} parent=1 // loop_footer_branch
      %12 = sbr.rel target = $region3
    $region8: #{tpu_custom_call.1} parent=1 // loop_exit
      _
    %453 = vsyncpa [#allocation3], 1
    %s454 = scalar_lea.sflag [#allocation3], 1
    %455 = vsyncpa %s454, 1
    %456 = vsyncpa [#allocation4], 1
    %s457 = scalar_lea.sflag [#allocation4], 1
    %458 = vsyncpa %s457, 1

</llo_original>
